<compile_context>
chip_gen: v7x
topology: tpu7x:2x2x1
jax: 0.10.0
libtpu: 0.0.40
codegen_flags: <defaults>
</compile_context>

<pallas_src>
import math
import functools

import jax
import jax.numpy as jnp
from jax import lax
from jax.experimental import pallas as pl
from jax.experimental.pallas import tpu as pltpu


# ---------------------------------------------------------------------------
# Tile helpers
# ---------------------------------------------------------------------------

def _choose_tile(n, cap, align):
    """Largest divisor of n <= cap, preferring multiples of `align` (then 8); else n."""
    if n <= cap:
        return n
    fallback = None
    for t in range(cap, 0, -1):
        if n % t == 0:
            if t % align == 0:
                return t
            if fallback is None and t % 8 == 0:
                fallback = t
    return fallback if fallback is not None else n


# ---------------------------------------------------------------------------
# Linear (tiled, pipelined) kernels
# ---------------------------------------------------------------------------

def _linear_kernel(x_ref, w_ref, o_ref):
    # x: (tm, K), w: (K, tn) -> o: (tm, tn); bf16 operands, f32 accumulation.
    o_ref[...] = jnp.dot(
        x_ref[...].astype(jnp.bfloat16), w_ref[...].astype(jnp.bfloat16),
        preferred_element_type=jnp.float32,
    ).astype(o_ref.dtype)


def _linear_bias_kernel(x_ref, w_ref, b_ref, o_ref):
    acc = jnp.dot(
        x_ref[...].astype(jnp.bfloat16), w_ref[...].astype(jnp.bfloat16),
        preferred_element_type=jnp.float32,
    )
    o_ref[...] = (acc + b_ref[...].astype(jnp.float32)).astype(o_ref.dtype)


def linear(x2d, w, b=None, *, out_dtype=None, tm_cap=256, tn_cap=512):
    """x2d: (M, K); w: (K, N) pre-transposed (in, out); optional b: (N,)."""
    M, K = x2d.shape
    N = w.shape[1]
    out_dtype = x2d.dtype if out_dtype is None else out_dtype
    tm = _choose_tile(M, tm_cap, 16)     # bf16 sublane pack = 16
    tn = _choose_tile(N, tn_cap, 128)    # lane-aligned output columns
    gm, gn = M // tm, N // tn

    # Grid ordering: re-stream whichever operand is cheaper to re-stream.
    #   rows outer (i, j): W re-DMA'd gm times, X once.
    #   cols outer (j, i): X re-DMA'd gn times, W once.
    w_restream = K * N * w.dtype.itemsize * max(gm - 1, 0)
    x_restream = M * K * x2d.dtype.itemsize * max(gn - 1, 0)
    if w_restream <= x_restream:
        grid = (gm, gn)
        x_map = lambda i, j: (i, 0)
        w_map = lambda i, j: (0, j)
        b_map = lambda i, j: (0, j)
        o_map = lambda i, j: (i, j)
    else:
        grid = (gn, gm)
        x_map = lambda j, i: (i, 0)
        w_map = lambda j, i: (0, j)
        b_map = lambda j, i: (0, j)
        o_map = lambda j, i: (i, j)

    # TODO(synk): add a K ('arbitrary') reduction axis with an f32 accumulator if K grows
    # beyond a few thousand; here K is query_dim/inner_dim and fits VMEM untiled.
    in_specs = [
        pl.BlockSpec((tm, K), x_map),
        pl.BlockSpec((K, tn), w_map),
    ]
    args = [x2d, w]
    if b is not None:
        in_specs.append(pl.BlockSpec((1, tn), b_map))
        args.append(b.reshape(1, N).astype(jnp.float32))
        kernel = _linear_bias_kernel
    else:
        kernel = _linear_kernel

    cost = pl.CostEstimate(
        flops=2 * M * K * N,
        transcendentals=0,
        bytes_accessed=(M * K * x2d.dtype.itemsize + K * N * w.dtype.itemsize
                        + M * N * jnp.dtype(out_dtype).itemsize),
    )
    return pl.pallas_call(
        kernel,
        out_shape=jax.ShapeDtypeStruct((M, N), out_dtype),
        grid=grid,
        in_specs=in_specs,
        out_specs=pl.BlockSpec((tm, tn), o_map),
        compiler_params=pltpu.CompilerParams(
            dimension_semantics=("parallel", "parallel")),
        cost_estimate=cost,
    )(*args)


# ---------------------------------------------------------------------------
# Flash attention kernel (online softmax over KV tiles, heads handled in-kernel)
# ---------------------------------------------------------------------------

def _flash_body(q_ref, kv_ref, bias, o_ref, m_sc, l_sc, acc_sc, *, heads, dim_head):
    kv_step = pl.program_id(2)
    H, D = heads, dim_head
    HD = H * D

    @pl.when(kv_step == 0)
    def _():
        m_sc[...] = jnp.full(m_sc.shape, -jnp.inf, dtype=m_sc.dtype)
        l_sc[...] = jnp.zeros(l_sc.shape, dtype=l_sc.dtype)
        acc_sc[...] = jnp.zeros(acc_sc.shape, dtype=acc_sc.dtype)

    # Static Python unroll over heads: lane slices of the resident (tq, H*D) q block
    # and the streaming (tk, 2*H*D) fused K|V block. Softmax scale already folded in w_q.
    for h in range(H):
        q = q_ref[0, :, pl.ds(h * D, D)]               # (tq, D) bf16
        k = kv_ref[0, :, pl.ds(h * D, D)]              # (tk, D) bf16
        v = kv_ref[0, :, pl.ds(HD + h * D, D)]         # (tk, D) bf16

        # QK^T: contract the last dims directly (no in-kernel K transpose).
        s = lax.dot_general(q, k, (((1,), (1,)), ((), ())),
                            preferred_element_type=jnp.float32)   # (tq, tk) f32
        if bias is not None:
            s = s + bias                                            # (1, tk) broadcast

        m_prev = m_sc[h]                                            # (tq, 1)
        m_new = jnp.maximum(m_prev, jnp.max(s, axis=-1, keepdims=True))
        alpha = jnp.exp(m_prev - m_new)
        # TODO(synk): on v6e/v7x the exp can be done in bf16 (bf16 EUP) for ~2x throughput.
        p = jnp.exp(s - m_new)                                      # (tq, tk) f32
        l_sc[h] = alpha * l_sc[h] + jnp.sum(p, axis=-1, keepdims=True)
        acc_sc[:, pl.ds(h * D, D)] = alpha * acc_sc[:, pl.ds(h * D, D)] + jnp.dot(
            p.astype(kv_ref.dtype), v, preferred_element_type=jnp.float32)
        m_sc[h] = m_new

    @pl.when(kv_step == pl.num_programs(2) - 1)
    def _():
        for h in range(H):
            inv = pl.reciprocal(l_sc[h], approx=True)               # EUP slot
            acc_sc[:, pl.ds(h * D, D)] = acc_sc[:, pl.ds(h * D, D)] * inv
        # Single lane-dense (tq, H*D) slab store.
        o_ref[0] = acc_sc[...].astype(o_ref.dtype)


def _flash_attn_kernel(q_ref, kv_ref, o_ref, m_sc, l_sc, acc_sc, *, heads, dim_head):
    _flash_body(q_ref, kv_ref, None, o_ref, m_sc, l_sc, acc_sc,
                heads=heads, dim_head=dim_head)


def _flash_attn_bias_kernel(q_ref, kv_ref, b_ref, o_ref, m_sc, l_sc, acc_sc, *,
                            heads, dim_head):
    bias = b_ref[0].astype(jnp.float32)                             # (1, tk)
    _flash_body(q_ref, kv_ref, bias, o_ref, m_sc, l_sc, acc_sc,
                heads=heads, dim_head=dim_head)


def flash_attention(q, kv, heads, dim_head, bias=None, *, tq_cap=256, tk_cap=512):
    """q: (B, N, H*D); kv: (B, M, 2*H*D) fused [K | V]; optional bias: (B, 1, M).

    Computes softmax(Q K^T + bias) V per head (scale already folded into Q) with an
    online softmax tiled over KV; heads are processed in-kernel so q/kv/out stay in
    their natural (B, Seq, H*D) layouts (no XLA head transposes).
    """
    B, N, HD = q.shape
    M = kv.shape[1]
    assert HD == heads * dim_head and kv.shape[2] == 2 * HD
    tq = _choose_tile(N, tq_cap, 16)     # bf16 sublane pack
    tk = _choose_tile(M, tk_cap, 128)
    grid = (B, N // tq, M // tk)

    in_specs = [
        pl.BlockSpec((1, tq, HD), lambda b, qi, ki: (b, qi, 0)),
        pl.BlockSpec((1, tk, 2 * HD), lambda b, qi, ki: (b, ki, 0)),
    ]
    args = [q, kv]
    if bias is not None:
        in_specs.append(pl.BlockSpec((1, 1, tk), lambda b, qi, ki: (b, 0, ki)))
        args.append(bias)
        kernel = functools.partial(_flash_attn_bias_kernel,
                                   heads=heads, dim_head=dim_head)
    else:
        kernel = functools.partial(_flash_attn_kernel,
                                   heads=heads, dim_head=dim_head)

    # TODO(synk): for heavily padded ragged batches, scalar-prefetch per-batch valid
    # lengths (PrefetchScalarGridSpec) and skip fully-masked KV tiles.
    cost = pl.CostEstimate(
        flops=4 * B * heads * N * M * dim_head,
        transcendentals=B * heads * N * M,
        bytes_accessed=(q.size * q.dtype.itemsize + kv.size * kv.dtype.itemsize
                        + B * N * HD * q.dtype.itemsize
                        + (bias.size * bias.dtype.itemsize if bias is not None else 0)),
    )
    return pl.pallas_call(
        kernel,
        out_shape=jax.ShapeDtypeStruct((B, N, HD), q.dtype),
        grid=grid,
        in_specs=in_specs,
        out_specs=pl.BlockSpec((1, tq, HD), lambda b, qi, ki: (b, qi, 0)),
        scratch_shapes=[
            pltpu.VMEM((heads, tq, 1), jnp.float32),   # running max (per head)
            pltpu.VMEM((heads, tq, 1), jnp.float32),   # running sum (per head)
            pltpu.VMEM((tq, HD), jnp.float32),         # output accumulator slab
        ],
        compiler_params=pltpu.CompilerParams(
            dimension_semantics=("parallel", "parallel", "arbitrary")),
        cost_estimate=cost,
    )(*args)


# ---------------------------------------------------------------------------
# MemoryEfficientCrossAttention (forward semantics of the PyTorch module)
# ---------------------------------------------------------------------------

class MemoryEfficientCrossAttentionPallas:
    def __init__(self, query_dim, context_dim=None, heads=8, dim_head=64,
                 dropout=0.0, key=None):
        inner_dim = dim_head * heads
        context_dim = query_dim if context_dim is None else context_dim
        self.heads = heads
        self.dim_head = dim_head
        self.query_dim = query_dim
        self.context_dim = context_dim
        self.inner_dim = inner_dim
        # Dropout is identity at inference (dropout=0.0 here anyway).

        if key is None:
            key = jax.random.PRNGKey(0)
        kq, kk, kv, ko, kb = jax.random.split(key, 5)
        # f32 master weights (pre-transposed to (in_features, out_features)).
        self.w_q = 0.1 * jax.random.normal(kq, (query_dim, inner_dim), jnp.float32)
        self.w_k = 0.1 * jax.random.normal(kk, (context_dim, inner_dim), jnp.float32)
        self.w_v = 0.1 * jax.random.normal(kv, (context_dim, inner_dim), jnp.float32)
        self.w_out = 0.1 * jax.random.normal(ko, (inner_dim, query_dim), jnp.float32)
        self.b_out = 0.1 * jax.random.normal(kb, (query_dim,), jnp.float32)

        # Kernel-side bf16 copies: softmax scale folded into w_q; K/V fused.
        scale = 1.0 / math.sqrt(dim_head)
        self.w_q_bf = (self.w_q * scale).astype(jnp.bfloat16)
        self.w_kv_bf = jnp.concatenate([self.w_k, self.w_v], axis=1).astype(jnp.bfloat16)
        self.w_out_bf = self.w_out.astype(jnp.bfloat16)

    def __call__(self, x, context=None, mask=None):
        # x: (b, n, query_dim); context: (b, m, context_dim) or None; mask: (b, m) or None
        b, n, _ = x.shape
        hd = self.inner_dim
        ctx = x if context is None else context
        m = ctx.shape[1]

        x2d = x.reshape(b * n, self.query_dim)
        c2d = ctx.reshape(b * m, self.context_dim)

        # Projections in bf16; Q carries the softmax scale, K|V are fused.
        q2d = linear(x2d, self.w_q_bf, out_dtype=jnp.bfloat16)      # (b*n, hd)
        kv2d = linear(c2d, self.w_kv_bf, out_dtype=jnp.bfloat16)    # (b*m, 2*hd)

        # Free reshapes only — no head-split transposes.
        q3 = q2d.reshape(b, n, hd)
        kv3 = kv2d.reshape(b, m, 2 * hd)

        # Compact attention bias: (b, 1, m), indexed per batch inside the kernel
        # (no per-head repeat, no (BH, N, M) tensor).
        if mask is not None:
            assert mask.shape == (b, m)
            max_neg = -jnp.finfo(jnp.float32).max
            bias = ((1.0 - mask.astype(jnp.float32)) * max_neg).reshape(b, 1, m)
        else:
            bias = None

        out = flash_attention(q3, kv3, self.heads, self.dim_head, bias)  # (b, n, hd) bf16

        # (b, n, hd) -> (b*n, hd): free reshape (heads already interleaved in lanes).
        out2d = out.reshape(b * n, hd)

        # Output projection (Linear + bias; Dropout identity at inference).
        y = linear(out2d, self.w_out_bf, self.b_out, out_dtype=x.dtype)
        return y.reshape(b, n, self.query_dim)


# ---------------------------------------------------------------------------
# Pure-JAX reference (f32) for sanity checking
# ---------------------------------------------------------------------------

def reference_forward(mod, x, context=None, mask=None):
    b, n, _ = x.shape
    context = x if context is None else context
    m = context.shape[1]
    h, d = mod.heads, mod.dim_head
    q = x @ mod.w_q
    k = context @ mod.w_k
    v = context @ mod.w_v
    q = q.reshape(b, n, h, d).transpose(0, 2, 1, 3).reshape(b * h, n, d)
    k = k.reshape(b, m, h, d).transpose(0, 2, 1, 3).reshape(b * h, m, d)
    v = v.reshape(b, m, h, d).transpose(0, 2, 1, 3).reshape(b * h, m, d)
    s = jnp.einsum("bnd,bmd->bnm", q, k) / math.sqrt(d)
    if mask is not None:
        max_neg = -jnp.finfo(x.dtype).max
        bias = (1.0 - mask.astype(x.dtype)) * max_neg
        bias = jnp.repeat(bias, h, axis=0).reshape(b * h, 1, m)
        s = s + bias
    p = jax.nn.softmax(s, axis=-1)
    out = jnp.einsum("bnm,bmd->bnd", p, v)
    out = out.reshape(b, h, n, d).transpose(0, 2, 1, 3).reshape(b, n, h * d)
    return out @ mod.w_out + mod.b_out


# ---------------------------------------------------------------------------
# Main
# ---------------------------------------------------------------------------

if __name__ == "__main__":
    key = jax.random.PRNGKey(0)
    k_x, k_ctx, k_w = jax.random.split(key, 3)

    b, n, query_dim = 2, 8, 32
    heads, dim_head = 2, 16          # inner_dim = 32
    m_ctx = 8

    x = jax.random.normal(k_x, (b, n, query_dim), jnp.float32)
    context = jax.random.normal(k_ctx, (b, m_ctx, query_dim), jnp.float32)
    mask = jnp.ones((b, m_ctx), jnp.float32).at[:, -2:].set(0.0)

    module = MemoryEfficientCrossAttentionPallas(
        query_dim=query_dim, context_dim=None, heads=heads, dim_head=dim_head,
        dropout=0.0, key=k_w,
    )

    # Self-attention path (no mask / no bias input).
    out_self = jax.block_until_ready(module(x))
    ref_self = reference_forward(module, x)
    assert out_self.shape == (b, n, query_dim)
    assert jnp.allclose(out_self, ref_self, atol=2e-2, rtol=2e-2), \
        float(jnp.max(jnp.abs(out_self - ref_self)))

    # Cross-attention path with a key-padding mask (compact (B,1,M) bias).
    out_cross = jax.block_until_ready(module(x, context=context, mask=mask))
    ref_cross = reference_forward(module, x, context=context, mask=mask)
    assert out_cross.shape == (b, n, query_dim)
    assert jnp.allclose(out_cross, ref_cross, atol=2e-2, rtol=2e-2), \
        float(jnp.max(jnp.abs(out_cross - ref_cross)))

    print("KERNEL_OK")
</pallas_src>

<mosaic_0001>
module attributes {stable_mosaic.version = 11 : i64} {
  func.func @_linear_kernel(%arg0: i32, %arg1: i32, %arg2: memref<16x32xf32, #tpu.memory_space<vmem>>, %arg3: memref<32x32xbf16, #tpu.memory_space<vmem>>, %arg4: memref<16x32xbf16, #tpu.memory_space<vmem>>) attributes {dimension_semantics = [#tpu.dimension_semantics<parallel>, #tpu.dimension_semantics<parallel>], iteration_bounds = array<i64: 1, 1>, scalar_prefetch = 0 : i64, scratch_operands = 0 : i64, tpu.core_type = #tpu.core_type<tc>, window_params = [{transform_indices = @transform_0, window_bounds = array<i64: 16, 32>}, {transform_indices = @transform_1, window_bounds = array<i64: 32, 32>}, {transform_indices = @transform_2, window_bounds = array<i64: 16, 32>}]} {
    %c0 = arith.constant 0 : index
    %c0_0 = arith.constant 0 : index
    %0 = vector.load %arg2[%c0, %c0_0] : memref<16x32xf32, #tpu.memory_space<vmem>>, vector<16x32xf32>
    %1 = arith.truncf %0 : vector<16x32xf32> to vector<16x32xbf16>
    %c0_1 = arith.constant 0 : index
    %c0_2 = arith.constant 0 : index
    %2 = vector.load %arg3[%c0_1, %c0_2] : memref<32x32xbf16, #tpu.memory_space<vmem>>, vector<32x32xbf16>
    %cst = arith.constant dense<0.000000e+00> : vector<16x32xf32>
    %3 = tpu.matmul %1, %2, %cst {dimension_numbers = #tpu.dot_dimension_numbers<[1], [0], [0], [1], [0, 0, 1, 1], [], []>} : vector<16x32xbf16>, vector<32x32xbf16>, vector<16x32xf32> -> vector<16x32xf32>
    %4 = arith.truncf %3 : vector<16x32xf32> to vector<16x32xbf16>
    %c0_3 = arith.constant 0 : index
    %c0_4 = arith.constant 0 : index
    %5 = vector.load %arg4[%c0_3, %c0_4] : memref<16x32xbf16, #tpu.memory_space<vmem>>, vector<16x32xbf16>
    tpu.vector_store %arg4[%c0_3, %c0_4], %4 {strides = array<i32>} : memref<16x32xbf16, #tpu.memory_space<vmem>>, vector<16x32xbf16>,
    return
  }
  func.func @transform_0(%arg0: i32, %arg1: i32) -> (i32, i32) {
    %c0_i32 = arith.constant 0 : i32
    %c0_i32_0 = arith.constant 0 : i32
    return %arg0, %c0_i32 : i32, i32
  }
  func.func @transform_1(%arg0: i32, %arg1: i32) -> (i32, i32) {
    %c0_i32 = arith.constant 0 : i32
    %c0_i32_0 = arith.constant 0 : i32
    return %c0_i32, %arg1 : i32, i32
  }
  func.func @transform_2(%arg0: i32, %arg1: i32) -> (i32, i32) {
    %c0_i32 = arith.constant 0 : i32
    return %arg0, %arg1 : i32, i32
  }
}

</mosaic_0001>

<llo_original>
// kernel: tpu_custom_call.1
$region0: #{tpu_custom_call.1}
  #allocation0 [shape = 'u32[]', space=smem, size = 0x4, offset = 0x4, fixed_abs, tag = 'smem constant byte address 0x4 - core index']
  #allocation1 [shape = 'u32[144,128]{1,0:T(1,128)}', space=vmem, size = 0x12000, scoped, tag = 'internal scratch']
  %s0 = inlined_call_operand.hbm [shape: f32[16,32], index: 0, kind: input, shape index: {}]
  %s1 = inlined_call_operand.hbm [shape: bf16[32,32], index: 1, kind: input, shape index: {}]
  %s2 = inlined_call_operand.hbm [shape: bf16[16,32], index: 2, kind: output, shape index: {}]
  %s3 = sld [smem:[#allocation0]]
  $region26: #{tpu_custom_call.1} parent=0
    _
  %s5 = ssub.s32 1, %s3
  %s6 = scalar_select 0, %s5, %s3
  $region1: #{tpu_custom_call.1} parent=0
    #allocation2 [shape = 'u8[8192]{0}', space=vmem, size = 0x2000, scoped, tag = 'input window, operand 0, single buffered']
    #allocation3 [shape = 's32[1]{0}', space=sflag, size = 0x4, scoped, tag = 'scoped memory for tpu_custom_call.1']
    #allocation4 [shape = 's32[1]{0}', space=sflag, size = 0x4, scoped, tag = 'scoped memory for tpu_custom_call.1']
    #allocation5 [shape = 'u8[8192]{0}', space=vmem, size = 0x2000, scoped, tag = 'input window, operand 1, single buffered']
    #allocation6 [shape = 's32[1]{0}', space=sflag, size = 0x4, scoped, tag = 'scoped memory for tpu_custom_call.1']
    #allocation7 [shape = 'u8[4096]{0}', space=vmem, size = 0x1000, scoped, tag = 'output window, operand 0, single buffered']
    %7 = vsyncpa [#allocation3], 0
    %8 = vsyncpa [#allocation6], 0
    %9 = vsyncpa [#allocation4], 0
    // Predicated region
    $region2: #{tpu_custom_call.1} parent=1 // pred_check
      _
    $region3: #{tpu_custom_call.1} parent=1 // pred_check_branch
      %11 = sbr.rel (0) target = $region5
    $region4: #{tpu_custom_call.1} parent=1 // pred_region
      %s13 = ssub.s32 256, 256
      %14 = vsyncadd [#allocation3], %s13
      %s15 = sshll.u32 [#allocation2], 4
      %s16 = int_to_ptr.vmem [resolvable:$true] %s15
      %21 = dma.hbm_to_vmem [thread:$0]  %s0, 256, %s16, [#allocation3], 128, 128, 8
    $region5: #{tpu_custom_call.1} parent=1 // pred_fallthru
      _
    // Predicated region
    $region6: #{tpu_custom_call.1} parent=1 // pred_check
      _
    $region7: #{tpu_custom_call.1} parent=1 // pred_check_branch
      %23 = sbr.rel (0) target = $region9
    $region8: #{tpu_custom_call.1} parent=1 // pred_region
      %s25 = ssub.s32 256, 256
      %26 = vsyncadd [#allocation6], %s25
      %s27 = sshll.u32 [#allocation5], 4
      %s28 = int_to_ptr.vmem [resolvable:$true] %s27
      %33 = dma.hbm_to_vmem [thread:$0]  %s1, 256, %s28, [#allocation6], 64, 64, 4
    $region9: #{tpu_custom_call.1} parent=1 // pred_fallthru
      _
    // Predicated region
    $region10: #{tpu_custom_call.1} parent=1 // pred_check
      _
    $region11: #{tpu_custom_call.1} parent=1 // pred_check_branch
      %35 = sbr.rel (0) target = $region13
    $region12: #{tpu_custom_call.1} parent=1 // pred_region
      %36 = dma.done [#allocation3], 256
    $region13: #{tpu_custom_call.1} parent=1 // pred_fallthru
      _
    // Predicated region
    $region14: #{tpu_custom_call.1} parent=1 // pred_check
      _
    $region15: #{tpu_custom_call.1} parent=1 // pred_check_branch
      %38 = sbr.rel (0) target = $region17
    $region16: #{tpu_custom_call.1} parent=1 // pred_region
      %39 = dma.done [#allocation6], 256
    $region17: #{tpu_custom_call.1} parent=1 // pred_fallthru
      _
    %v41 = vld [vmem:[#allocation2] sm:$0xff]
    %v42 = vld [vmem:[#allocation2 + $0x8] sm:$0xff]
    %v43 = vpack.c.bf16 %v42, %v41
    %v44 = vld [vmem:[#allocation5] sm:$0xf]
    %v45 = vld [vmem:[#allocation5 + $0x4] sm:$0xf]
    %v46 = vld [vmem:[#allocation5 + $0x8] sm:$0xf]
    %v47 = vld [vmem:[#allocation5 + $0xc] sm:$0xf]
    %v52 = vunpack.c.l.b16 %v44
    %v53 = vunpack.c.l.b16 %v45
    %v54 = vunpack.c.l.b16 %v46
    %v55 = vunpack.c.l.b16 %v47
    %v56 = vpack.c.b16 %v53, %v52
    %v57 = vpack.c.b16 %v55, %v54
    %vm60 = vcmask 261120
    %v62 = vsel %vm60, %v43, 0
    %64 = vmatprep.subr.bf16.mxu0 0
    %65 = vmatpush1.bf16.msra.mxu0 %v56
    %66 = vmatprep.subr.bf16.mxu0 0
    %67 = vmatpush1.bf16.msra.mxu0 %v57
    %68 = vmatprep.subr.bf16.mxu0 0
    %69 = vmatpush1.bf16.msra.mxu0 0
    %70 = vmatprep.subr.bf16.mxu0 0
    %71 = vmatpush1.bf16.msra.mxu0 0
    %72 = vmatprep.subr.bf16.mxu0 0
    %73 = vmatpush1.bf16.msra.mxu0 0
    %74 = vmatprep.subr.bf16.mxu0 0
    %75 = vmatpush1.bf16.msra.mxu0 0
    %76 = vmatprep.subr.bf16.mxu0 0
    %77 = vmatpush1.bf16.msra.mxu0 0
    %78 = vmatprep.subr.bf16.mxu0 0
    %79 = vmatpush1.bf16.msra.mxu0 0
    %80 = vmatprep.subr.bf16.mxu0 0
    %81 = vmatpush1.bf16.msra.mxu0 0
    %82 = vmatprep.subr.bf16.mxu0 0
    %83 = vmatpush1.bf16.msra.mxu0 0
    %84 = vmatprep.subr.bf16.mxu0 0
    %85 = vmatpush1.bf16.msra.mxu0 0
    %86 = vmatprep.subr.bf16.mxu0 0
    %87 = vmatpush1.bf16.msra.mxu0 0
    %88 = vmatprep.subr.bf16.mxu0 0
    %89 = vmatpush1.bf16.msra.mxu0 0
    %90 = vmatprep.subr.bf16.mxu0 0
    %91 = vmatpush1.bf16.msra.mxu0 0
    %92 = vmatprep.subr.bf16.mxu0 0
    %93 = vmatpush1.bf16.msra.mxu0 0
    %94 = vmatprep.subr.bf16.mxu0 0
    %95 = vmatpush1.bf16.msra.mxu0 0
    %96 = vmatprep.mubr.bf16.mxu0 0
    %97 = vmatmul.mubr.bf16.gmra.mrb[0].mxu0 %v62
    %v98 = vpop.f32.mrb[0].mxu0
    %v99 = vadd.f32 0.0, %v98
    %v100 = vpop.f32.mrb[0].mxu0
    %v101 = vpop.f32.mrb[0].mxu0
    %v102 = vadd.f32 0.0, %v101
    %v103 = vpop.f32.mrb[0].mxu0
    %104 = vdwg.mxu0
    %v105 = vpack.c.bf16 %v102, %v99
    %v107 = vunpack.c.l.b16 %v105
    %v108 = vunpack.c.h.b16 %v105
    %v109 = vpack.c.b16 %v107, %v107
    %v110 = vpack.c.b16 %v108, %v108
    %vm113 = vcmask 257024
    %114 = vst.msk [vmem:[#allocation7] sm:$0xf] %vm113, %v109
    %115 = vst.msk [vmem:[#allocation7 + $0x4] sm:$0xf] %vm113, %v110
    // Predicated region
    $region18: #{tpu_custom_call.1} parent=1 // pred_check
      _
    $region19: #{tpu_custom_call.1} parent=1 // pred_check_branch
      %117 = sbr.rel (0) target = $region21
    $region20: #{tpu_custom_call.1} parent=1 // pred_region
      %s119 = ssub.s32 128, 128
      %120 = vsyncadd [#allocation4], %s119
      %s121 = sshll.u32 [#allocation7], 4
      %s122 = int_to_ptr.vmem [resolvable:$true] %s121
      %127 = dma.vmem_to_hbm [thread:$0]  %s122, 128, %s2, [#allocation4], 64, 64, 4
    $region21: #{tpu_custom_call.1} parent=1 // pred_fallthru
      _
    // Predicated region
    $region22: #{tpu_custom_call.1} parent=1 // pred_check
      _
    $region23: #{tpu_custom_call.1} parent=1 // pred_check_branch
      %129 = sbr.rel (0) target = $region25
    $region24: #{tpu_custom_call.1} parent=1 // pred_region
      %130 = dma.done [#allocation4], 128
    $region25: #{tpu_custom_call.1} parent=1 // pred_fallthru
      _
    %131 = vsyncpa [#allocation3], 1
    %132 = vsyncpa [#allocation6], 1
    %133 = vsyncpa [#allocation4], 1

</llo_original>
